<compile_context>
chip_gen: v7x
topology: tpu7x:2x2x1
jax: 0.10.0
libtpu: 0.0.40
codegen_flags: <defaults>
</compile_context>

<pallas_src>
import functools

import jax
import jax.numpy as jnp
from jax import lax
from jax.experimental import pallas as pl
from jax.experimental.pallas import tpu as pltpu


# ----------------------------------------------------------------------------
# Fused Pallas kernel
# ----------------------------------------------------------------------------

def _fused_forward_kernel(a_s_ref, a_f_ref, xs_ref, w_enc_ref, b_enc_ref,
                          w_dec_ref, b_dec_ref, gamma_ref, beta_ref,
                          hi_ref, h_ref, loss_ref,
                          *, n, temperature, mse_count):
    a_s = a_s_ref[...]                     # (N, N) normalized spatial adjacency
    a_f = a_f_ref[...]                     # (N, N) normalized feature adjacency
    xs = xs_ref[...]                       # (3N, Fp): [x ; x_p ; x_n], padded
    w_enc = w_enc_ref[...]                 # (Fp, Dp)
    b_enc = b_enc_ref[...]                 # (1, Dp)
    w_dec = w_dec_ref[...]                 # (Dp, Fp)
    b_dec = b_dec_ref[...]                 # (1, Fp)
    gamma = gamma_ref[...]                 # (1, Dp)
    beta = beta_ref[...]                   # (1, Dp)

    # ---- encoder: one shared-weight MXU pass for all three branches ----
    xw = jnp.dot(xs, w_enc, preferred_element_type=jnp.float32)     # (3N, Dp)
    hi = jnp.dot(a_s, xw[0:n], preferred_element_type=jnp.float32) + b_enc
    h1p = jnp.dot(a_f, xw[n:2 * n], preferred_element_type=jnp.float32) + b_enc
    h2p = jnp.dot(a_s, xw[2 * n:3 * n], preferred_element_type=jnp.float32) + b_enc

    # ---- decoder on the clean branch ----
    hiw = jnp.dot(hi, w_dec, preferred_element_type=jnp.float32)
    h = jnp.dot(a_s, hiw, preferred_element_type=jnp.float32) + b_dec

    # ---- fused BatchNorm1d (batch stats, biased var) + ELU(alpha=1) ----
    def bn_elu(v):
        mean = jnp.mean(v, axis=0, keepdims=True)
        var = jnp.mean(v * v, axis=0, keepdims=True) - mean * mean
        y = (v - mean) * lax.rsqrt(var + 1e-5) * gamma + beta
        # ELU(alpha=1): y if y > 0 else exp(y) - 1   (clamped arg keeps exp safe)
        return jnp.where(y > 0, y, jnp.exp(jnp.minimum(y, 0.0)) - 1.0)

    h0 = bn_elu(hi)
    h1 = bn_elu(h1p)
    h2 = bn_elu(h2p)

    # ---- lane-dense outputs (padded; sliced back in the wrapper) ----
    hi_ref[...] = hi
    h_ref[...] = h

    # ---- reconstruction loss (padded lanes are zero in both x and h) ----
    d = xs[0:n] - h
    loss_rec = jnp.sum(d * d) / mse_count

    # ---- InfoNCE (negative_mode='unpaired', label 0, mean reduction) ----
    def l2n(v):
        ss = jnp.sum(v * v, axis=-1, keepdims=True)
        return v * lax.rsqrt(jnp.maximum(ss, 1e-24))   # eps^2 == (1e-12)^2

    q = l2n(h0)
    p = l2n(h1)
    ng = l2n(h2)

    inv_t = 1.0 / temperature
    pos = jnp.sum(q * p, axis=1, keepdims=True) * inv_t              # (N, 1)
    neg = lax.dot_general(q, ng, (((1,), (1,)), ((), ())),           # (N, M)
                          preferred_element_type=jnp.float32) * inv_t

    m_neg = jnp.max(neg, axis=1, keepdims=True)
    lse_neg = m_neg + jnp.log(jnp.sum(jnp.exp(neg - m_neg), axis=1, keepdims=True))
    m_all = jnp.maximum(pos, lse_neg)
    lse = m_all + jnp.log(jnp.exp(pos - m_all) + jnp.exp(lse_neg - m_all))
    loss_ctr = jnp.mean(lse - pos)

    loss_ref[0, 0] = loss_rec + 0.2 * loss_ctr


# ----------------------------------------------------------------------------
# Wrapper: lane-dense padding + single pallas_call
# ----------------------------------------------------------------------------

_VMEM = pl.BlockSpec(memory_space=pltpu.MemorySpace.VMEM)
_SMEM = pl.BlockSpec(memory_space=pltpu.MemorySpace.SMEM)


def _round_up(v, m):
    return (v + m - 1) // m * m


def _pad2d(a, rows, cols):
    return jnp.pad(a, ((0, rows - a.shape[0]), (0, cols - a.shape[1])))


def fused_forward(a_s, a_f, x, x_p, x_n, w_enc, b_enc, w_dec, b_dec,
                  gamma, beta, *, temperature):
    n, in_dim = x.shape
    latent = w_enc.shape[1]
    in_p = _round_up(in_dim, 128)
    lat_p = _round_up(latent, 128)

    # stack the three encoder inputs (shared w_enc) and zero-pad feature dims
    x_stack = jnp.concatenate(
        [_pad2d(x, n, in_p), _pad2d(x_p, n, in_p), _pad2d(x_n, n, in_p)], axis=0)

    w_enc_p = _pad2d(w_enc, in_p, lat_p)
    w_dec_p = _pad2d(w_dec, lat_p, in_p)
    b_enc_p = _pad2d(b_enc.reshape(1, -1), 1, lat_p)
    b_dec_p = _pad2d(b_dec.reshape(1, -1), 1, in_p)
    gamma_p = _pad2d(gamma.reshape(1, -1), 1, lat_p)
    beta_p = _pad2d(beta.reshape(1, -1), 1, lat_p)

    hi_p, h_p, loss = pl.pallas_call(
        functools.partial(
            _fused_forward_kernel,
            n=n,
            temperature=float(temperature),
            mse_count=float(n * in_dim)),
        out_shape=(
            jax.ShapeDtypeStruct((n, lat_p), jnp.float32),
            jax.ShapeDtypeStruct((n, in_p), jnp.float32),
            jax.ShapeDtypeStruct((1, 1), jnp.float32),
        ),
        in_specs=[_VMEM] * 9,
        out_specs=(_VMEM, _VMEM, _SMEM),
    )(a_s, a_f, x_stack, w_enc_p, b_enc_p, w_dec_p, b_dec_p, gamma_p, beta_p)

    return hi_p[:, :latent], h_p[:, :in_dim], loss[0, 0]


# ----------------------------------------------------------------------------
# Glue: graph augmentations, GCN normalization, parameters
# ----------------------------------------------------------------------------

def gcn_normalize(adj):
    """D^{-1/2} (A + 2I) D^{-1/2}  — GCNConv(improved=True) normalization."""
    n = adj.shape[0]
    a = adj + 2.0 * jnp.eye(n, dtype=adj.dtype)
    deg = jnp.sum(a, axis=1)
    dinv = 1.0 / jnp.sqrt(deg)
    return a * dinv[:, None] * dinv[None, :]


def shuffle_node(x, key):
    perm = jax.random.permutation(key, x.shape[0])
    return x[perm]


def mask_feature(x, p, key):
    # torch_geometric.utils.mask_feature, mode='col', fill_value=0
    keep = (jax.random.uniform(key, (1, x.shape[1])) >= p).astype(x.dtype)
    return x * keep


class ModelParams:
    def __init__(self, key, in_dim, latent_dim):
        k1, k2 = jax.random.split(key)
        # glorot-style init for GCNConv weights, zero bias; BN gamma=1, beta=0
        s_enc = (6.0 / (in_dim + latent_dim)) ** 0.5
        s_dec = (6.0 / (latent_dim + in_dim)) ** 0.5
        self.w_enc = jax.random.uniform(
            k1, (in_dim, latent_dim), jnp.float32, -s_enc, s_enc)
        self.b_enc = jnp.zeros((latent_dim,), jnp.float32)
        self.w_dec = jax.random.uniform(
            k2, (latent_dim, in_dim), jnp.float32, -s_dec, s_dec)
        self.b_dec = jnp.zeros((in_dim,), jnp.float32)
        self.gamma = jnp.ones((latent_dim,), jnp.float32)
        self.beta = jnp.zeros((latent_dim,), jnp.float32)


def model_forward(params, x, a_s, a_f, *, drop_feat_p, temperature,
                  mode_his, aug_key):
    """Mirrors Model.forward (mode_his != 'his' path uses g_s for enc/dec)."""
    k_shuf, k_mask = jax.random.split(aug_key)
    x_n = shuffle_node(x, k_shuf)
    x_p = mask_feature(x, drop_feat_p, k_mask)

    # TODO(synk): mode_his == 'his' branch is identical math on a different
    # adjacency (g_h); only the non-'his' branch is exercised here.
    del mode_his

    return fused_forward(
        a_s, a_f, x, x_p, x_n,
        params.w_enc, params.b_enc, params.w_dec, params.b_dec,
        params.gamma, params.beta,
        temperature=temperature)


# ----------------------------------------------------------------------------
# Main
# ----------------------------------------------------------------------------

if __name__ == "__main__":
    N, IN_DIM, LATENT = 8, 16, 32
    DROP_FEAT_P, TEMP = 0.3, 0.5

    root = jax.random.PRNGKey(0)
    k_x, k_gs, k_gf, k_par, k_aug = jax.random.split(root, 5)

    # node features
    x = jax.random.normal(k_x, (N, IN_DIM), jnp.float32)

    # two random symmetric graphs (spatial g_s and feature g_f), unit weights
    def random_adj(key):
        a = (jax.random.uniform(key, (N, N)) < 0.4).astype(jnp.float32)
        a = jnp.maximum(a, a.T) * (1.0 - jnp.eye(N, dtype=jnp.float32))
        return gcn_normalize(a)

    a_s = random_adj(k_gs)
    a_f = random_adj(k_gf)

    params = ModelParams(k_par, IN_DIM, LATENT)

    hi, h, loss = model_forward(
        params, x, a_s, a_f,
        drop_feat_p=DROP_FEAT_P, temperature=TEMP,
        mode_his="spatial", aug_key=k_aug)

    jax.block_until_ready((hi, h, loss))
    assert hi.shape == (N, LATENT) and h.shape == (N, IN_DIM)
    assert loss.shape == () and bool(jnp.isfinite(loss))
    print("KERNEL_OK")
</pallas_src>

<mosaic_0001>
module attributes {stable_mosaic.version = 11 : i64} {
  func.func @_fused_forward_kernel(%arg0: memref<8x8xf32, #tpu.memory_space<vmem>>, %arg1: memref<8x8xf32, #tpu.memory_space<vmem>>, %arg2: memref<24x128xf32, #tpu.memory_space<vmem>>, %arg3: memref<128x128xf32, #tpu.memory_space<vmem>>, %arg4: memref<1x128xf32, #tpu.memory_space<vmem>>, %arg5: memref<128x128xf32, #tpu.memory_space<vmem>>, %arg6: memref<1x128xf32, #tpu.memory_space<vmem>>, %arg7: memref<1x128xf32, #tpu.memory_space<vmem>>, %arg8: memref<1x128xf32, #tpu.memory_space<vmem>>, %arg9: memref<8x128xf32, #tpu.memory_space<vmem>>, %arg10: memref<8x128xf32, #tpu.memory_space<vmem>>, %arg11: memref<1x1xf32, #tpu.memory_space<smem>>) attributes {dimension_semantics = [], scalar_prefetch = 0 : i64, scratch_operands = 0 : i64, tpu.core_type = #tpu.core_type<tc>} {
    %c0 = arith.constant 0 : index
    %c0_0 = arith.constant 0 : index
    %0 = vector.load %arg0[%c0, %c0_0] : memref<8x8xf32, #tpu.memory_space<vmem>>, vector<8x8xf32>
    %c0_1 = arith.constant 0 : index
    %c0_2 = arith.constant 0 : index
    %1 = vector.load %arg1[%c0_1, %c0_2] : memref<8x8xf32, #tpu.memory_space<vmem>>, vector<8x8xf32>
    %c0_3 = arith.constant 0 : index
    %c0_4 = arith.constant 0 : index
    %2 = vector.load %arg2[%c0_3, %c0_4] : memref<24x128xf32, #tpu.memory_space<vmem>>, vector<24x128xf32>
    %c0_5 = arith.constant 0 : index
    %c0_6 = arith.constant 0 : index
    %3 = vector.load %arg3[%c0_5, %c0_6] : memref<128x128xf32, #tpu.memory_space<vmem>>, vector<128x128xf32>
    %c0_7 = arith.constant 0 : index
    %c0_8 = arith.constant 0 : index
    %4 = vector.load %arg4[%c0_7, %c0_8] : memref<1x128xf32, #tpu.memory_space<vmem>>, vector<1x128xf32>
    %c0_9 = arith.constant 0 : index
    %c0_10 = arith.constant 0 : index
    %5 = vector.load %arg5[%c0_9, %c0_10] : memref<128x128xf32, #tpu.memory_space<vmem>>, vector<128x128xf32>
    %c0_11 = arith.constant 0 : index
    %c0_12 = arith.constant 0 : index
    %6 = vector.load %arg6[%c0_11, %c0_12] : memref<1x128xf32, #tpu.memory_space<vmem>>, vector<1x128xf32>
    %c0_13 = arith.constant 0 : index
    %c0_14 = arith.constant 0 : index
    %7 = vector.load %arg7[%c0_13, %c0_14] : memref<1x128xf32, #tpu.memory_space<vmem>>, vector<1x128xf32>
    %c0_15 = arith.constant 0 : index
    %c0_16 = arith.constant 0 : index
    %8 = vector.load %arg8[%c0_15, %c0_16] : memref<1x128xf32, #tpu.memory_space<vmem>>, vector<1x128xf32>
    %cst = arith.constant dense<0.000000e+00> : vector<24x128xf32>
    %9 = tpu.matmul %2, %3, %cst {dimension_numbers = #tpu.dot_dimension_numbers<[1], [0], [0], [1], [0, 0, 1, 1], [], []>} : vector<24x128xf32>, vector<128x128xf32>, vector<24x128xf32> -> vector<24x128xf32>
    %10 = vector.extract_strided_slice %9 {offsets = [0, 0], sizes = [8, 128], strides = [1, 1]} : vector<24x128xf32> to vector<8x128xf32>
    %cst_17 = arith.constant dense<0.000000e+00> : vector<8x128xf32>
    %11 = tpu.matmul %0, %10, %cst_17 {dimension_numbers = #tpu.dot_dimension_numbers<[1], [0], [0], [1], [0, 0, 1, 1], [], []>} : vector<8x8xf32>, vector<8x128xf32>, vector<8x128xf32> -> vector<8x128xf32>
    %12 = vector.broadcast %4 : vector<1x128xf32> to vector<8x128xf32>
    %13 = arith.addf %11, %12 : vector<8x128xf32>
    %14 = vector.extract_strided_slice %9 {offsets = [8, 0], sizes = [8, 128], strides = [1, 1]} : vector<24x128xf32> to vector<8x128xf32>
    %cst_18 = arith.constant dense<0.000000e+00> : vector<8x128xf32>
    %15 = tpu.matmul %1, %14, %cst_18 {dimension_numbers = #tpu.dot_dimension_numbers<[1], [0], [0], [1], [0, 0, 1, 1], [], []>} : vector<8x8xf32>, vector<8x128xf32>, vector<8x128xf32> -> vector<8x128xf32>
    %16 = vector.broadcast %4 : vector<1x128xf32> to vector<8x128xf32>
    %17 = arith.addf %15, %16 : vector<8x128xf32>
    %18 = vector.extract_strided_slice %9 {offsets = [16, 0], sizes = [8, 128], strides = [1, 1]} : vector<24x128xf32> to vector<8x128xf32>
    %cst_19 = arith.constant dense<0.000000e+00> : vector<8x128xf32>
    %19 = tpu.matmul %0, %18, %cst_19 {dimension_numbers = #tpu.dot_dimension_numbers<[1], [0], [0], [1], [0, 0, 1, 1], [], []>} : vector<8x8xf32>, vector<8x128xf32>, vector<8x128xf32> -> vector<8x128xf32>
    %20 = vector.broadcast %4 : vector<1x128xf32> to vector<8x128xf32>
    %21 = arith.addf %19, %20 : vector<8x128xf32>
    %cst_20 = arith.constant dense<0.000000e+00> : vector<8x128xf32>
    %22 = tpu.matmul %13, %5, %cst_20 {dimension_numbers = #tpu.dot_dimension_numbers<[1], [0], [0], [1], [0, 0, 1, 1], [], []>} : vector<8x128xf32>, vector<128x128xf32>, vector<8x128xf32> -> vector<8x128xf32>
    %cst_21 = arith.constant dense<0.000000e+00> : vector<8x128xf32>
    %23 = tpu.matmul %0, %22, %cst_21 {dimension_numbers = #tpu.dot_dimension_numbers<[1], [0], [0], [1], [0, 0, 1, 1], [], []>} : vector<8x8xf32>, vector<8x128xf32>, vector<8x128xf32> -> vector<8x128xf32>
    %24 = vector.broadcast %6 : vector<1x128xf32> to vector<8x128xf32>
    %25 = arith.addf %23, %24 : vector<8x128xf32>
    %cst_22 = arith.constant dense<0.000000e+00> : vector<128xf32>
    %26 = vector.multi_reduction <add>, %13, %cst_22 [0] : vector<8x128xf32> to vector<128xf32>
    %27 = vector.shape_cast %26 : vector<128xf32> to vector<1x128xf32>
    %cst_23 = arith.constant 8.000000e+00 : f32
    %28 = vector.broadcast %cst_23 : f32 to vector<1x128xf32>
    %29 = arith.divf %27, %28 : vector<1x128xf32>
    %30 = arith.mulf %13, %13 : vector<8x128xf32>
    %cst_24 = arith.constant dense<0.000000e+00> : vector<128xf32>
    %31 = vector.multi_reduction <add>, %30, %cst_24 [0] : vector<8x128xf32> to vector<128xf32>
    %32 = vector.shape_cast %31 : vector<128xf32> to vector<1x128xf32>
    %cst_25 = arith.constant 8.000000e+00 : f32
    %33 = vector.broadcast %cst_25 : f32 to vector<1x128xf32>
    %34 = arith.divf %32, %33 : vector<1x128xf32>
    %35 = arith.mulf %29, %29 : vector<1x128xf32>
    %36 = arith.subf %34, %35 : vector<1x128xf32>
    %37 = vector.broadcast %29 : vector<1x128xf32> to vector<8x128xf32>
    %38 = arith.subf %13, %37 : vector<8x128xf32>
    %cst_26 = arith.constant 9.99999974E-6 : f32
    %39 = vector.broadcast %cst_26 : f32 to vector<1x128xf32>
    %40 = arith.addf %36, %39 : vector<1x128xf32>
    %41 = math.rsqrt %40 : vector<1x128xf32>
    %42 = vector.broadcast %41 : vector<1x128xf32> to vector<8x128xf32>
    %43 = arith.mulf %38, %42 : vector<8x128xf32>
    %44 = vector.broadcast %7 : vector<1x128xf32> to vector<8x128xf32>
    %45 = arith.mulf %43, %44 : vector<8x128xf32>
    %46 = vector.broadcast %8 : vector<1x128xf32> to vector<8x128xf32>
    %47 = arith.addf %45, %46 : vector<8x128xf32>
    %cst_27 = arith.constant 0.000000e+00 : f32
    %48 = vector.broadcast %cst_27 : f32 to vector<8x128xf32>
    %49 = arith.cmpf ogt, %47, %48 : vector<8x128xf32>
    %cst_28 = arith.constant 0.000000e+00 : f32
    %50 = vector.broadcast %cst_28 : f32 to vector<8x128xf32>
    %51 = arith.minimumf %47, %50 : vector<8x128xf32>
    %52 = math.exp %51 : vector<8x128xf32>
    %cst_29 = arith.constant 1.000000e+00 : f32
    %53 = vector.broadcast %cst_29 : f32 to vector<8x128xf32>
    %54 = arith.subf %52, %53 : vector<8x128xf32>
    %55 = arith.select %49, %47, %54 : vector<8x128xi1>, vector<8x128xf32>
    %cst_30 = arith.constant dense<0.000000e+00> : vector<128xf32>
    %56 = vector.multi_reduction <add>, %17, %cst_30 [0] : vector<8x128xf32> to vector<128xf32>
    %57 = vector.shape_cast %56 : vector<128xf32> to vector<1x128xf32>
    %cst_31 = arith.constant 8.000000e+00 : f32
    %58 = vector.broadcast %cst_31 : f32 to vector<1x128xf32>
    %59 = arith.divf %57, %58 : vector<1x128xf32>
    %60 = arith.mulf %17, %17 : vector<8x128xf32>
    %cst_32 = arith.constant dense<0.000000e+00> : vector<128xf32>
    %61 = vector.multi_reduction <add>, %60, %cst_32 [0] : vector<8x128xf32> to vector<128xf32>
    %62 = vector.shape_cast %61 : vector<128xf32> to vector<1x128xf32>
    %cst_33 = arith.constant 8.000000e+00 : f32
    %63 = vector.broadcast %cst_33 : f32 to vector<1x128xf32>
    %64 = arith.divf %62, %63 : vector<1x128xf32>
    %65 = arith.mulf %59, %59 : vector<1x128xf32>
    %66 = arith.subf %64, %65 : vector<1x128xf32>
    %67 = vector.broadcast %59 : vector<1x128xf32> to vector<8x128xf32>
    %68 = arith.subf %17, %67 : vector<8x128xf32>
    %cst_34 = arith.constant 9.99999974E-6 : f32
    %69 = vector.broadcast %cst_34 : f32 to vector<1x128xf32>
    %70 = arith.addf %66, %69 : vector<1x128xf32>
    %71 = math.rsqrt %70 : vector<1x128xf32>
    %72 = vector.broadcast %71 : vector<1x128xf32> to vector<8x128xf32>
    %73 = arith.mulf %68, %72 : vector<8x128xf32>
    %74 = vector.broadcast %7 : vector<1x128xf32> to vector<8x128xf32>
    %75 = arith.mulf %73, %74 : vector<8x128xf32>
    %76 = vector.broadcast %8 : vector<1x128xf32> to vector<8x128xf32>
    %77 = arith.addf %75, %76 : vector<8x128xf32>
    %cst_35 = arith.constant 0.000000e+00 : f32
    %78 = vector.broadcast %cst_35 : f32 to vector<8x128xf32>
    %79 = arith.cmpf ogt, %77, %78 : vector<8x128xf32>
    %cst_36 = arith.constant 0.000000e+00 : f32
    %80 = vector.broadcast %cst_36 : f32 to vector<8x128xf32>
    %81 = arith.minimumf %77, %80 : vector<8x128xf32>
    %82 = math.exp %81 : vector<8x128xf32>
    %cst_37 = arith.constant 1.000000e+00 : f32
    %83 = vector.broadcast %cst_37 : f32 to vector<8x128xf32>
    %84 = arith.subf %82, %83 : vector<8x128xf32>
    %85 = arith.select %79, %77, %84 : vector<8x128xi1>, vector<8x128xf32>
    %cst_38 = arith.constant dense<0.000000e+00> : vector<128xf32>
    %86 = vector.multi_reduction <add>, %21, %cst_38 [0] : vector<8x128xf32> to vector<128xf32>
    %87 = vector.shape_cast %86 : vector<128xf32> to vector<1x128xf32>
    %cst_39 = arith.constant 8.000000e+00 : f32
    %88 = vector.broadcast %cst_39 : f32 to vector<1x128xf32>
    %89 = arith.divf %87, %88 : vector<1x128xf32>
    %90 = arith.mulf %21, %21 : vector<8x128xf32>
    %cst_40 = arith.constant dense<0.000000e+00> : vector<128xf32>
    %91 = vector.multi_reduction <add>, %90, %cst_40 [0] : vector<8x128xf32> to vector<128xf32>
    %92 = vector.shape_cast %91 : vector<128xf32> to vector<1x128xf32>
    %cst_41 = arith.constant 8.000000e+00 : f32
    %93 = vector.broadcast %cst_41 : f32 to vector<1x128xf32>
    %94 = arith.divf %92, %93 : vector<1x128xf32>
    %95 = arith.mulf %89, %89 : vector<1x128xf32>
    %96 = arith.subf %94, %95 : vector<1x128xf32>
    %97 = vector.broadcast %89 : vector<1x128xf32> to vector<8x128xf32>
    %98 = arith.subf %21, %97 : vector<8x128xf32>
    %cst_42 = arith.constant 9.99999974E-6 : f32
    %99 = vector.broadcast %cst_42 : f32 to vector<1x128xf32>
    %100 = arith.addf %96, %99 : vector<1x128xf32>
    %101 = math.rsqrt %100 : vector<1x128xf32>
    %102 = vector.broadcast %101 : vector<1x128xf32> to vector<8x128xf32>
    %103 = arith.mulf %98, %102 : vector<8x128xf32>
    %104 = vector.broadcast %7 : vector<1x128xf32> to vector<8x128xf32>
    %105 = arith.mulf %103, %104 : vector<8x128xf32>
    %106 = vector.broadcast %8 : vector<1x128xf32> to vector<8x128xf32>
    %107 = arith.addf %105, %106 : vector<8x128xf32>
    %cst_43 = arith.constant 0.000000e+00 : f32
    %108 = vector.broadcast %cst_43 : f32 to vector<8x128xf32>
    %109 = arith.cmpf ogt, %107, %108 : vector<8x128xf32>
    %cst_44 = arith.constant 0.000000e+00 : f32
    %110 = vector.broadcast %cst_44 : f32 to vector<8x128xf32>
    %111 = arith.minimumf %107, %110 : vector<8x128xf32>
    %112 = math.exp %111 : vector<8x128xf32>
    %cst_45 = arith.constant 1.000000e+00 : f32
    %113 = vector.broadcast %cst_45 : f32 to vector<8x128xf32>
    %114 = arith.subf %112, %113 : vector<8x128xf32>
    %115 = arith.select %109, %107, %114 : vector<8x128xi1>, vector<8x128xf32>
    %c0_46 = arith.constant 0 : index
    %c0_47 = arith.constant 0 : index
    %116 = vector.load %arg9[%c0_46, %c0_47] : memref<8x128xf32, #tpu.memory_space<vmem>>, vector<8x128xf32>
    tpu.vector_store %arg9[%c0_46, %c0_47], %13 {strides = array<i32>} : memref<8x128xf32, #tpu.memory_space<vmem>>, vector<8x128xf32>,
    %c0_48 = arith.constant 0 : index
    %c0_49 = arith.constant 0 : index
    %117 = vector.load %arg10[%c0_48, %c0_49] : memref<8x128xf32, #tpu.memory_space<vmem>>, vector<8x128xf32>
    tpu.vector_store %arg10[%c0_48, %c0_49], %25 {strides = array<i32>} : memref<8x128xf32, #tpu.memory_space<vmem>>, vector<8x128xf32>,
    %118 = vector.extract_strided_slice %2 {offsets = [0, 0], sizes = [8, 128], strides = [1, 1]} : vector<24x128xf32> to vector<8x128xf32>
    %119 = arith.subf %118, %25 : vector<8x128xf32>
    %120 = arith.mulf %119, %119 : vector<8x128xf32>
    %121 = vector.shape_cast %120 : vector<8x128xf32> to vector<1x8x128xf32>
    %cst_50 = arith.constant dense<0.000000e+00> : vector<1xf32>
    %122 = vector.multi_reduction <add>, %121, %cst_50 [1, 2] : vector<1x8x128xf32> to vector<1xf32>
    %123 = vector.shape_cast %122 : vector<1xf32> to vector<1x1x1xf32>
    %124 = vector.extract %123[0, 0, 0] : f32 from vector<1x1x1xf32>
    %cst_51 = arith.constant 1.280000e+02 : f32
    %125 = arith.divf %124, %cst_51 : f32
    %126 = arith.mulf %55, %55 : vector<8x128xf32>
    %cst_52 = arith.constant dense<0.000000e+00> : vector<8xf32>
    %127 = vector.multi_reduction <add>, %126, %cst_52 [1] : vector<8x128xf32> to vector<8xf32>
    %128 = vector.shape_cast %127 : vector<8xf32> to vector<8x1xf32>
    %cst_53 = arith.constant 1.000000e-24 : f32
    %129 = vector.broadcast %cst_53 : f32 to vector<8x1xf32>
    %130 = arith.maximumf %128, %129 : vector<8x1xf32>
    %131 = math.rsqrt %130 : vector<8x1xf32>
    %132 = vector.broadcast %131 : vector<8x1xf32> to vector<8x128xf32>
    %133 = arith.mulf %55, %132 : vector<8x128xf32>
    %134 = arith.mulf %85, %85 : vector<8x128xf32>
    %cst_54 = arith.constant dense<0.000000e+00> : vector<8xf32>
    %135 = vector.multi_reduction <add>, %134, %cst_54 [1] : vector<8x128xf32> to vector<8xf32>
    %136 = vector.shape_cast %135 : vector<8xf32> to vector<8x1xf32>
    %cst_55 = arith.constant 1.000000e-24 : f32
    %137 = vector.broadcast %cst_55 : f32 to vector<8x1xf32>
    %138 = arith.maximumf %136, %137 : vector<8x1xf32>
    %139 = math.rsqrt %138 : vector<8x1xf32>
    %140 = vector.broadcast %139 : vector<8x1xf32> to vector<8x128xf32>
    %141 = arith.mulf %85, %140 : vector<8x128xf32>
    %142 = arith.mulf %115, %115 : vector<8x128xf32>
    %cst_56 = arith.constant dense<0.000000e+00> : vector<8xf32>
    %143 = vector.multi_reduction <add>, %142, %cst_56 [1] : vector<8x128xf32> to vector<8xf32>
    %144 = vector.shape_cast %143 : vector<8xf32> to vector<8x1xf32>
    %cst_57 = arith.constant 1.000000e-24 : f32
    %145 = vector.broadcast %cst_57 : f32 to vector<8x1xf32>
    %146 = arith.maximumf %144, %145 : vector<8x1xf32>
    %147 = math.rsqrt %146 : vector<8x1xf32>
    %148 = vector.broadcast %147 : vector<8x1xf32> to vector<8x128xf32>
    %149 = arith.mulf %115, %148 : vector<8x128xf32>
    %150 = arith.mulf %133, %141 : vector<8x128xf32>
    %cst_58 = arith.constant dense<0.000000e+00> : vector<8xf32>
    %151 = vector.multi_reduction <add>, %150, %cst_58 [1] : vector<8x128xf32> to vector<8xf32>
    %152 = vector.shape_cast %151 : vector<8xf32> to vector<8x1xf32>
    %cst_59 = arith.constant 2.000000e+00 : f32
    %153 = vector.broadcast %cst_59 : f32 to vector<8x1xf32>
    %154 = arith.mulf %152, %153 : vector<8x1xf32>
    %cst_60 = arith.constant dense<0.000000e+00> : vector<8x8xf32>
    %155 = tpu.matmul %133, %149, %cst_60 {dimension_numbers = #tpu.dot_dimension_numbers<[1], [1], [0], [0], [0, 0, 1, 0], [], []>} : vector<8x128xf32>, vector<8x128xf32>, vector<8x8xf32> -> vector<8x8xf32>
    %cst_61 = arith.constant 2.000000e+00 : f32
    %156 = vector.broadcast %cst_61 : f32 to vector<8x8xf32>
    %157 = arith.mulf %155, %156 : vector<8x8xf32>
    %cst_62 = arith.constant dense<0xFF800000> : vector<8xf32>
    %158 = vector.multi_reduction <maximumf>, %157, %cst_62 [1] : vector<8x8xf32> to vector<8xf32>
    %159 = vector.shape_cast %158 : vector<8xf32> to vector<8x1xf32>
    %160 = vector.broadcast %159 : vector<8x1xf32> to vector<8x8xf32>
    %161 = arith.subf %157, %160 : vector<8x8xf32>
    %162 = math.exp %161 : vector<8x8xf32>
    %cst_63 = arith.constant dense<0.000000e+00> : vector<8xf32>
    %163 = vector.multi_reduction <add>, %162, %cst_63 [1] : vector<8x8xf32> to vector<8xf32>
    %164 = vector.shape_cast %163 : vector<8xf32> to vector<8x1xf32>
    %165 = math.log %164 : vector<8x1xf32>
    %166 = arith.addf %159, %165 : vector<8x1xf32>
    %167 = arith.maximumf %154, %166 : vector<8x1xf32>
    %168 = arith.subf %154, %167 : vector<8x1xf32>
    %169 = math.exp %168 : vector<8x1xf32>
    %170 = arith.subf %166, %167 : vector<8x1xf32>
    %171 = math.exp %170 : vector<8x1xf32>
    %172 = arith.addf %169, %171 : vector<8x1xf32>
    %173 = math.log %172 : vector<8x1xf32>
    %174 = arith.addf %167, %173 : vector<8x1xf32>
    %175 = arith.subf %174, %154 : vector<8x1xf32>
    %176 = vector.shape_cast %175 : vector<8x1xf32> to vector<1x8x1xf32>
    %cst_64 = arith.constant dense<0.000000e+00> : vector<1xf32>
    %177 = vector.multi_reduction <add>, %176, %cst_64 [1, 2] : vector<1x8x1xf32> to vector<1xf32>
    %178 = vector.shape_cast %177 : vector<1xf32> to vector<1x1x1xf32>
    %179 = vector.extract %178[0, 0, 0] : f32 from vector<1x1x1xf32>
    %cst_65 = arith.constant 8.000000e+00 : f32
    %180 = arith.divf %179, %cst_65 : f32
    %cst_66 = arith.constant 2.000000e-01 : f32
    %181 = arith.mulf %cst_66, %180 : f32
    %182 = arith.addf %125, %181 : f32
    %c0_67 = arith.constant 0 : index
    %c0_68 = arith.constant 0 : index
    %183 = memref.load %arg11[%c0_67, %c0_68] : memref<1x1xf32, #tpu.memory_space<smem>>
    memref.store %182, %arg11[%c0_67, %c0_68] : memref<1x1xf32, #tpu.memory_space<smem>>
    return
  }
}

</mosaic_0001>

<llo_original>
// kernel: tpu_custom_call.1
$region0: #{tpu_custom_call.1}
  #allocation0 [shape = 'u32[]', space=smem, size = 0x4, offset = 0x4, fixed_abs, tag = 'smem constant byte address 0x4 - core index']
  #allocation1 [shape = 'u32[144,128]{1,0:T(1,128)}', space=vmem, size = 0x12000, scoped, tag = 'internal scratch']
  %s0 = inlined_call_operand.hbm [shape: f32[8,8], index: 0, kind: input, shape index: {}]
  %s1 = inlined_call_operand.hbm [shape: f32[8,8], index: 1, kind: input, shape index: {}]
  %s2 = inlined_call_operand.hbm [shape: f32[24,128], index: 2, kind: input, shape index: {}]
  %s3 = inlined_call_operand.hbm [shape: f32[128,128], index: 3, kind: input, shape index: {}]
  %s4 = inlined_call_operand.vmem [shape: f32[1,128], index: 4, kind: input, shape index: {}]
  %s5 = inlined_call_operand.hbm [shape: f32[128,128], index: 5, kind: input, shape index: {}]
  %s6 = inlined_call_operand.vmem [shape: f32[1,128], index: 6, kind: input, shape index: {}]
  %s7 = inlined_call_operand.vmem [shape: f32[1,128], index: 7, kind: input, shape index: {}]
  %s8 = inlined_call_operand.vmem [shape: f32[1,128], index: 8, kind: input, shape index: {}]
  %s9 = inlined_call_operand.hbm [shape: f32[8,128], index: 9, kind: output, shape index: {0}]
  %s10 = inlined_call_operand.hbm [shape: f32[8,128], index: 10, kind: output, shape index: {1}]
  %s11 = inlined_call_operand.hbm [shape: f32[1,1], index: 11, kind: output, shape index: {2}]
  %12 = xla_tuple %s9, %s10, %s11
  %s13 = sld [smem:[#allocation0]]
  $region82: #{tpu_custom_call.1} parent=0
    _
  %s15 = ssub.s32 1, %s13
  %s16 = scalar_select 0, %s15, %s13
  $region1: #{tpu_custom_call.1} parent=0
    #allocation2 [shape = 'u8[4096]{0}', space=vmem, size = 0x1000, scoped, tag = 'input window, operand 0, single buffered']
    #allocation3 [shape = 's32[1]{0}', space=sflag, size = 0x4, scoped, tag = 'scoped memory for tpu_custom_call.1']
    #allocation4 [shape = 's32[1]{0}', space=sflag, size = 0x4, scoped, tag = 'scoped memory for tpu_custom_call.1']
    #allocation5 [shape = 's32[1]{0}', space=sflag, size = 0x4, scoped, tag = 'scoped memory for tpu_custom_call.1']
    #allocation6 [shape = 'u8[4096]{0}', space=vmem, size = 0x1000, scoped, tag = 'input window, operand 1, single buffered']
    #allocation7 [shape = 's32[1]{0}', space=sflag, size = 0x4, scoped, tag = 'scoped memory for tpu_custom_call.1']
    #allocation8 [shape = 'u8[12288]{0}', space=vmem, size = 0x3000, scoped, tag = 'input window, operand 2, single buffered']
    #allocation9 [shape = 'u8[65536]{0}', space=vmem, size = 0x10000, scoped, tag = 'input window, operand 3, single buffered']
    #allocation10 [shape = 's32[1]{0}', space=sflag, size = 0x4, scoped, tag = 'scoped memory for tpu_custom_call.1']
    #allocation11 [shape = 'u8[65536]{0}', space=vmem, size = 0x10000, scoped, tag = 'input window, operand 5, single buffered']
    #allocation12 [shape = 'u8[4096]{0}', space=vmem, size = 0x1000, scoped, tag = 'output window, operand 0, single buffered']
    #allocation13 [shape = 'u8[4096]{0}', space=vmem, size = 0x1000, scoped, tag = 'output window, operand 1, single buffered']
    #allocation14 [shape = 's32[1]{0}', space=sflag, size = 0x4, scoped, tag = 'scoped memory for tpu_custom_call.1']
    #allocation15 [shape = 'u8[512]{0}', space=smem, size = 0x200, scoped, tag = 'output window, operand 2, single buffered']
    %17 = vsyncpa [#allocation3], 0
    %18 = vsyncpa [#allocation7], 0
    %19 = vsyncpa [#allocation10], 0
    %20 = vsyncpa [#allocation4], 0
    %21 = vsyncpa [#allocation14], 0
    %22 = vsyncpa [#allocation5], 0
    // Predicated region
    $region2: #{tpu_custom_call.1} parent=1 // pred_check
      _
    $region3: #{tpu_custom_call.1} parent=1 // pred_check_branch
      %24 = sbr.rel (0) target = $region5
    $region4: #{tpu_custom_call.1} parent=1 // pred_region
      %s26 = ssub.s32 128, 128
      %27 = vsyncadd [#allocation3], %s26
      %s29 = sshll.u32 [#allocation2], 4
      %s30 = int_to_ptr.vmem [resolvable:$true] %s29
      %32 = dma.hbm_to_vmem [thread:$0]  %s0, 128, %s30, [#allocation3]
    $region5: #{tpu_custom_call.1} parent=1 // pred_fallthru
      _
    // Predicated region
    $region6: #{tpu_custom_call.1} parent=1 // pred_check
      _
    $region7: #{tpu_custom_call.1} parent=1 // pred_check_branch
      %34 = sbr.rel (0) target = $region9
    $region8: #{tpu_custom_call.1} parent=1 // pred_region
      %s36 = ssub.s32 128, 128
      %37 = vsyncadd [#allocation7], %s36
      %s39 = sshll.u32 [#allocation6], 4
      %s40 = int_to_ptr.vmem [resolvable:$true] %s39
      %42 = dma.hbm_to_vmem [thread:$0]  %s1, 128, %s40, [#allocation7]
    $region9: #{tpu_custom_call.1} parent=1 // pred_fallthru
      _
    // Predicated region
    $region10: #{tpu_custom_call.1} parent=1 // pred_check
      _
    $region11: #{tpu_custom_call.1} parent=1 // pred_check_branch
      %44 = sbr.rel (0) target = $region13
    $region12: #{tpu_custom_call.1} parent=1 // pred_region
      %s46 = ssub.s32 384, 384
      %47 = vsyncadd [#allocation7], %s46
      %s48 = sshll.u32 [#allocation8], 4
      %s49 = int_to_ptr.vmem [resolvable:$true] %s48
      %54 = dma.hbm_to_vmem [thread:$0]  %s2, 384, %s49, [#allocation7], 128, 128, 8
    $region13: #{tpu_custom_call.1} parent=1 // pred_fallthru
      _
    // Predicated region
    $region14: #{tpu_custom_call.1} parent=1 // pred_check
      _
    $region15: #{tpu_custom_call.1} parent=1 // pred_check_branch
      %56 = sbr.rel (0) target = $region17
    $region16: #{tpu_custom_call.1} parent=1 // pred_region
      %s58 = ssub.s32 2048, 2048
      %59 = vsyncadd [#allocation10], %s58
      %s60 = sshll.u32 [#allocation9], 4
      %s61 = int_to_ptr.vmem [resolvable:$true] %s60
      %66 = dma.hbm_to_vmem [thread:$0]  %s3, 2048, %s61, [#allocation10], 128, 128, 8
    $region17: #{tpu_custom_call.1} parent=1 // pred_fallthru
      _
    // Predicated region
    $region18: #{tpu_custom_call.1} parent=1 // pred_check
      _
    $region19: #{tpu_custom_call.1} parent=1 // pred_check_branch
      %68 = sbr.rel (0) target = $region21
    $region20: #{tpu_custom_call.1} parent=1 // pred_region
      _
    $region21: #{tpu_custom_call.1} parent=1 // pred_fallthru
      _
    // Predicated region
    $region22: #{tpu_custom_call.1} parent=1 // pred_check
      _
    $region23: #{tpu_custom_call.1} parent=1 // pred_check_branch
      %70 = sbr.rel (0) target = $region25
    $region24: #{tpu_custom_call.1} parent=1 // pred_region
      %s72 = ssub.s32 2048, 2048
      %73 = vsyncadd [#allocation10], %s72
      %s74 = sshll.u32 [#allocation11], 4
      %s75 = int_to_ptr.vmem [resolvable:$true] %s74
      %80 = dma.hbm_to_vmem [thread:$0]  %s5, 2048, %s75, [#allocation10], 128, 128, 8
    $region25: #{tpu_custom_call.1} parent=1 // pred_fallthru
      _
    // Predicated region
    $region26: #{tpu_custom_call.1} parent=1 // pred_check
      _
    $region27: #{tpu_custom_call.1} parent=1 // pred_check_branch
      %82 = sbr.rel (0) target = $region29
    $region28: #{tpu_custom_call.1} parent=1 // pred_region
      _
    $region29: #{tpu_custom_call.1} parent=1 // pred_fallthru
      _
    // Predicated region
    $region30: #{tpu_custom_call.1} parent=1 // pred_check
      _
    $region31: #{tpu_custom_call.1} parent=1 // pred_check_branch
      %84 = sbr.rel (0) target = $region33
    $region32: #{tpu_custom_call.1} parent=1 // pred_region
      _
    $region33: #{tpu_custom_call.1} parent=1 // pred_fallthru
      _
    // Predicated region
    $region34: #{tpu_custom_call.1} parent=1 // pred_check
      _
    $region35: #{tpu_custom_call.1} parent=1 // pred_check_branch
      %86 = sbr.rel (0) target = $region37
    $region36: #{tpu_custom_call.1} parent=1 // pred_region
      _
    $region37: #{tpu_custom_call.1} parent=1 // pred_fallthru
      _
    // Predicated region
    $region38: #{tpu_custom_call.1} parent=1 // pred_check
      _
    $region39: #{tpu_custom_call.1} parent=1 // pred_check_branch
      %88 = sbr.rel (0) target = $region41
    $region40: #{tpu_custom_call.1} parent=1 // pred_region
      %89 = dma.done [#allocation3], 128
    $region41: #{tpu_custom_call.1} parent=1 // pred_fallthru
      _
    // Predicated region
    $region42: #{tpu_custom_call.1} parent=1 // pred_check
      _
    $region43: #{tpu_custom_call.1} parent=1 // pred_check_branch
      %91 = sbr.rel (0) target = $region45
    $region44: #{tpu_custom_call.1} parent=1 // pred_region
      %92 = dma.done [#allocation7], 128
    $region45: #{tpu_custom_call.1} parent=1 // pred_fallthru
      _
    // Predicated region
    $region46: #{tpu_custom_call.1} parent=1 // pred_check
      _
    $region47: #{tpu_custom_call.1} parent=1 // pred_check_branch
      %94 = sbr.rel (0) target = $region49
    $region48: #{tpu_custom_call.1} parent=1 // pred_region
      %95 = dma.done [#allocation7], 384
    $region49: #{tpu_custom_call.1} parent=1 // pred_fallthru
      _
    // Predicated region
    $region50: #{tpu_custom_call.1} parent=1 // pred_check
      _
    $region51: #{tpu_custom_call.1} parent=1 // pred_check_branch
      %97 = sbr.rel (0) target = $region53
    $region52: #{tpu_custom_call.1} parent=1 // pred_region
      %98 = dma.done [#allocation10], 2048
    $region53: #{tpu_custom_call.1} parent=1 // pred_fallthru
      _
    // Predicated region
    $region54: #{tpu_custom_call.1} parent=1 // pred_check
      _
    $region55: #{tpu_custom_call.1} parent=1 // pred_check_branch
      %100 = sbr.rel (0) target = $region57
    $region56: #{tpu_custom_call.1} parent=1 // pred_region
      %101 = dma.done [#allocation10], 2048
    $region57: #{tpu_custom_call.1} parent=1 // pred_fallthru
      _
    %v102 = vld [vmem:[#allocation2] sm:$0xff]
    %v103 = vld [vmem:[#allocation6] sm:$0xff]
    %v104 = vld [vmem:[#allocation8] sm:$0xff]
    %v105 = vld [vmem:[#allocation8 + $0x8] sm:$0xff]
    %v106 = vld [vmem:[#allocation8 + $0x10] sm:$0xff]
    %v107 = vld [vmem:[#allocation9] sm:$0xff]
    %v108 = vld [vmem:[#allocation9 + $0x8] sm:$0xff]
    %v109 = vld [vmem:[#allocation9 + $0x10] sm:$0xff]
    %v110 = vld [vmem:[#allocation9 + $0x18] sm:$0xff]
    %v111 = vld [vmem:[#allocation9 + $0x20] sm:$0xff]
    %v112 = vld [vmem:[#allocation9 + $0x28] sm:$0xff]
    %v113 = vld [vmem:[#allocation9 + $0x30] sm:$0xff]
    %v114 = vld [vmem:[#allocation9 + $0x38] sm:$0xff]
    %v115 = vld [vmem:[#allocation9 + $0x40] sm:$0xff]
    %v116 = vld [vmem:[#allocation9 + $0x48] sm:$0xff]
    %v117 = vld [vmem:[#allocation9 + $0x50] sm:$0xff]
    %v118 = vld [vmem:[#allocation9 + $0x58] sm:$0xff]
    %v119 = vld [vmem:[#allocation9 + $0x60] sm:$0xff]
    %v120 = vld [vmem:[#allocation9 + $0x68] sm:$0xff]
    %v121 = vld [vmem:[#allocation9 + $0x70] sm:$0xff]
    %v122 = vld [vmem:[#allocation9 + $0x78] sm:$0xff]
    %v123 = vld [vmem:[%s4] sm:$0x1]
    %v124 = vld [vmem:[#allocation11] sm:$0xff]
    %v125 = vld [vmem:[#allocation11 + $0x8] sm:$0xff]
    %v126 = vld [vmem:[#allocation11 + $0x10] sm:$0xff]
    %v127 = vld [vmem:[#allocation11 + $0x18] sm:$0xff]
    %v128 = vld [vmem:[#allocation11 + $0x20] sm:$0xff]
    %v129 = vld [vmem:[#allocation11 + $0x28] sm:$0xff]
    %v130 = vld [vmem:[#allocation11 + $0x30] sm:$0xff]
    %v131 = vld [vmem:[#allocation11 + $0x38] sm:$0xff]
    %v132 = vld [vmem:[#allocation11 + $0x40] sm:$0xff]
    %v133 = vld [vmem:[#allocation11 + $0x48] sm:$0xff]
    %v134 = vld [vmem:[#allocation11 + $0x50] sm:$0xff]
    %v135 = vld [vmem:[#allocation11 + $0x58] sm:$0xff]
    %v136 = vld [vmem:[#allocation11 + $0x60] sm:$0xff]
    %v137 = vld [vmem:[#allocation11 + $0x68] sm:$0xff]
    %v138 = vld [vmem:[#allocation11 + $0x70] sm:$0xff]
    %v139 = vld [vmem:[#allocation11 + $0x78] sm:$0xff]
    %v140 = vld [vmem:[%s6] sm:$0x1]
    %v141 = vld [vmem:[%s7] sm:$0x1]
    %v142 = vld [vmem:[%s8] sm:$0x1]
    %143 = vmatprep.subr.mxu0 0.0
    %144 = vmatpush1.msra.mxu0 %v107
    %145 = vmatprep.subr.mxu0 0.0
    %146 = vmatpush1.msra.mxu0 %v108
    %147 = vmatprep.subr.mxu0 0.0
    %148 = vmatpush1.msra.mxu0 %v109
    %149 = vmatprep.subr.mxu0 0.0
    %150 = vmatpush1.msra.mxu0 %v110
    %151 = vmatprep.subr.mxu0 0.0
    %152 = vmatpush1.msra.mxu0 %v111
    %153 = vmatprep.subr.mxu0 0.0
    %154 = vmatpush1.msra.mxu0 %v112
    %155 = vmatprep.subr.mxu0 0.0
    %156 = vmatpush1.msra.mxu0 %v113
    %157 = vmatprep.subr.mxu0 0.0
    %158 = vmatpush1.msra.mxu0 %v114
    %159 = vmatprep.subr.mxu0 0.0
    %160 = vmatpush1.msra.mxu0 %v115
    %161 = vmatprep.subr.mxu0 0.0
    %162 = vmatpush1.msra.mxu0 %v116
    %163 = vmatprep.subr.mxu0 0.0
    %164 = vmatpush1.msra.mxu0 %v117
    %165 = vmatprep.subr.mxu0 0.0
    %166 = vmatpush1.msra.mxu0 %v118
    %167 = vmatprep.subr.mxu0 0.0
    %168 = vmatpush1.msra.mxu0 %v119
    %169 = vmatprep.subr.mxu0 0.0
    %170 = vmatpush1.msra.mxu0 %v120
    %171 = vmatprep.subr.mxu0 0.0
    %172 = vmatpush1.msra.mxu0 %v121
    %173 = vmatprep.subr.mxu0 0.0
    %174 = vmatpush1.msra.mxu0 %v122
    %175 = vmatprep.subr.mxu0 0.0
    %176 = vmatpush1.msra.mxu0 0.0
    %177 = vmatprep.subr.mxu0 0.0
    %178 = vmatpush1.msra.mxu0 0.0
    %179 = vmatprep.subr.mxu0 0.0
    %180 = vmatpush1.msra.mxu0 0.0
    %181 = vmatprep.subr.mxu0 0.0
    %182 = vmatpush1.msra.mxu0 0.0
    %183 = vmatprep.subr.mxu0 0.0
    %184 = vmatpush1.msra.mxu0 0.0
    %185 = vmatprep.subr.mxu0 0.0
    %186 = vmatpush1.msra.mxu0 0.0
    %187 = vmatprep.subr.mxu0 0.0
    %188 = vmatpush1.msra.mxu0 0.0
    %189 = vmatprep.subr.mxu0 0.0
    %190 = vmatpush1.msra.mxu0 0.0
    %191 = vmatprep.subr.mxu0 0.0
    %192 = vmatpush1.msra.mxu0 0.0
    %193 = vmatprep.subr.mxu0 0.0
    %194 = vmatpush1.msra.mxu0 0.0
    %195 = vmatprep.subr.mxu0 0.0
    %196 = vmatpush1.msra.mxu0 0.0
    %197 = vmatprep.subr.mxu0 0.0
    %198 = vmatpush1.msra.mxu0 0.0
    %199 = vmatprep.subr.mxu0 0.0
    %200 = vmatpush1.msra.mxu0 0.0
    %201 = vmatprep.subr.mxu0 0.0
    %202 = vmatpush1.msra.mxu0 0.0
    %203 = vmatprep.subr.mxu0 0.0
    %204 = vmatpush1.msra.mxu0 0.0
    %205 = vmatprep.subr.mxu0 0.0
    %206 = vmatpush1.msra.mxu0 0.0
    %207 = vmatprep.mubr.f32.mxu0 0.0
    %208 = vmatmul.mubr.f32.gmra.mrb[0].mxu0 %v104
    %v209 = vpop.f32.mrb[0].mxu0
    %v210 = vadd.f32 0.0, %v209
    %v211 = vpop.f32.mrb[0].mxu0
    %212 = vmatprep.mubr.f32.mxu0 0.0
    %213 = vmatmul.mubr.f32.gmra.mrb[0].mxu0 %v105
    %v214 = vpop.f32.mrb[0].mxu0
    %v215 = vadd.f32 0.0, %v214
    %v216 = vpop.f32.mrb[0].mxu0
    %217 = vmatprep.mubr.f32.mxu0 0.0
    %218 = vmatmul.mubr.f32.gmra.mrb[0].mxu0 %v106
    %v219 = vpop.f32.mrb[0].mxu0
    %v220 = vadd.f32 0.0, %v219
    %v221 = vpop.f32.mrb[0].mxu0
    %222 = vdwg.mxu0
    %v224 = vlaneseq
    %v225 = vshrl.u32 %v224, 7
    %v226 = vsub.s32 0, %v225
    %v227 = vrot.slane %v123, %v226
    %vm229 = vcmask 64512
    %v231 = vsel %vm229, %v102, 0
    %233 = vmatprep.subr.mxu0 0.0
    %234 = vmatpush1.msra.mxu0 %v210
    %235 = vmatprep.subr.mxu0 0.0
    %236 = vmatpush1.msra.mxu0 0.0
    %237 = vmatprep.subr.mxu0 0.0
    %238 = vmatpush1.msra.mxu0 0.0
    %239 = vmatprep.subr.mxu0 0.0
    %240 = vmatpush1.msra.mxu0 0.0
    %241 = vmatprep.subr.mxu0 0.0
    %242 = vmatpush1.msra.mxu0 0.0
    %243 = vmatprep.subr.mxu0 0.0
    %244 = vmatpush1.msra.mxu0 0.0
    %245 = vmatprep.subr.mxu0 0.0
    %246 = vmatpush1.msra.mxu0 0.0
    %247 = vmatprep.subr.mxu0 0.0
    %248 = vmatpush1.msra.mxu0 0.0
    %249 = vmatprep.subr.mxu0 0.0
    %250 = vmatpush1.msra.mxu0 0.0
    %251 = vmatprep.subr.mxu0 0.0
    %252 = vmatpush1.msra.mxu0 0.0
    %253 = vmatprep.subr.mxu0 0.0
    %254 = vmatpush1.msra.mxu0 0.0
    %255 = vmatprep.subr.mxu0 0.0
    %256 = vmatpush1.msra.mxu0 0.0
    %257 = vmatprep.subr.mxu0 0.0
    %258 = vmatpush1.msra.mxu0 0.0
    %259 = vmatprep.subr.mxu0 0.0
    %260 = vmatpush1.msra.mxu0 0.0
    %261 = vmatprep.subr.mxu0 0.0
    %262 = vmatpush1.msra.mxu0 0.0
    %263 = vmatprep.subr.mxu0 0.0
    %264 = vmatpush1.msra.mxu0 0.0
    %265 = vmatprep.subr.mxu0 0.0
    %266 = vmatpush1.msra.mxu0 0.0
    %267 = vmatprep.subr.mxu0 0.0
    %268 = vmatpush1.msra.mxu0 0.0
    %269 = vmatprep.subr.mxu0 0.0
    %270 = vmatpush1.msra.mxu0 0.0
    %271 = vmatprep.subr.mxu0 0.0
    %272 = vmatpush1.msra.mxu0 0.0
    %273 = vmatprep.subr.mxu0 0.0
    %274 = vmatpush1.msra.mxu0 0.0
    %275 = vmatprep.subr.mxu0 0.0
    %276 = vmatpush1.msra.mxu0 0.0
    %277 = vmatprep.subr.mxu0 0.0
    %278 = vmatpush1.msra.mxu0 0.0
    %279 = vmatprep.subr.mxu0 0.0
    %280 = vmatpush1.msra.mxu0 0.0
    %281 = vmatprep.subr.mxu0 0.0
    %282 = vmatpush1.msra.mxu0 0.0
    %283 = vmatprep.subr.mxu0 0.0
    %284 = vmatpush1.msra.mxu0 0.0
    %285 = vmatprep.subr.mxu0 0.0
    %286 = vmatpush1.msra.mxu0 0.0
    %287 = vmatprep.subr.mxu0 0.0
    %288 = vmatpush1.msra.mxu0 0.0
    %289 = vmatprep.subr.mxu0 0.0
    %290 = vmatpush1.msra.mxu0 0.0
    %291 = vmatprep.subr.mxu0 0.0
    %292 = vmatpush1.msra.mxu0 0.0
    %293 = vmatprep.subr.mxu0 0.0
    %294 = vmatpush1.msra.mxu0 0.0
    %295 = vmatprep.subr.mxu0 0.0
    %296 = vmatpush1.msra.mxu0 0.0
    %297 = vmatprep.mubr.f32.mxu0 0.0
    %298 = vmatmul.mubr.f32.gmra.mrb[0].mxu0 %v231
    %v299 = vpop.f32.mrb[0].mxu0
    %v300 = vadd.f32 %v227, %v299
    %v301 = vpop.f32.mrb[0].mxu0
    %302 = vdwg.mxu0
    %v304 = vsel %vm229, %v103, 0
    %306 = vmatprep.subr.mxu0 0.0
    %307 = vmatpush1.msra.mxu0 %v215
    %308 = vmatprep.subr.mxu0 0.0
    %309 = vmatpush1.msra.mxu0 0.0
    %310 = vmatprep.subr.mxu0 0.0
    %311 = vmatpush1.msra.mxu0 0.0
    %312 = vmatprep.subr.mxu0 0.0
    %313 = vmatpush1.msra.mxu0 0.0
    %314 = vmatprep.subr.mxu0 0.0
    %315 = vmatpush1.msra.mxu0 0.0
    %316 = vmatprep.subr.mxu0 0.0
    %317 = vmatpush1.msra.mxu0 0.0
    %318 = vmatprep.subr.mxu0 0.0
    %319 = vmatpush1.msra.mxu0 0.0
    %320 = vmatprep.subr.mxu0 0.0
    %321 = vmatpush1.msra.mxu0 0.0
    %322 = vmatprep.subr.mxu0 0.0
    %323 = vmatpush1.msra.mxu0 0.0
    %324 = vmatprep.subr.mxu0 0.0
    %325 = vmatpush1.msra.mxu0 0.0
    %326 = vmatprep.subr.mxu0 0.0
    %327 = vmatpush1.msra.mxu0 0.0
    %328 = vmatprep.subr.mxu0 0.0
    %329 = vmatpush1.msra.mxu0 0.0
    %330 = vmatprep.subr.mxu0 0.0
    %331 = vmatpush1.msra.mxu0 0.0
    %332 = vmatprep.subr.mxu0 0.0
    %333 = vmatpush1.msra.mxu0 0.0
    %334 = vmatprep.subr.mxu0 0.0
    %335 = vmatpush1.msra.mxu0 0.0
    %336 = vmatprep.subr.mxu0 0.0
    %337 = vmatpush1.msra.mxu0 0.0
    %338 = vmatprep.subr.mxu0 0.0
    %339 = vmatpush1.msra.mxu0 0.0
    %340 = vmatprep.subr.mxu0 0.0
    %341 = vmatpush1.msra.mxu0 0.0
    %342 = vmatprep.subr.mxu0 0.0
    %343 = vmatpush1.msra.mxu0 0.0
    %344 = vmatprep.subr.mxu0 0.0
    %345 = vmatpush1.msra.mxu0 0.0
    %346 = vmatprep.subr.mxu0 0.0
    %347 = vmatpush1.msra.mxu0 0.0
    %348 = vmatprep.subr.mxu0 0.0
    %349 = vmatpush1.msra.mxu0 0.0
    %350 = vmatprep.subr.mxu0 0.0
    %351 = vmatpush1.msra.mxu0 0.0
    %352 = vmatprep.subr.mxu0 0.0
    %353 = vmatpush1.msra.mxu0 0.0
    %354 = vmatprep.subr.mxu0 0.0
    %355 = vmatpush1.msra.mxu0 0.0
    %356 = vmatprep.subr.mxu0 0.0
    %357 = vmatpush1.msra.mxu0 0.0
    %358 = vmatprep.subr.mxu0 0.0
    %359 = vmatpush1.msra.mxu0 0.0
    %360 = vmatprep.subr.mxu0 0.0
    %361 = vmatpush1.msra.mxu0 0.0
    %362 = vmatprep.subr.mxu0 0.0
    %363 = vmatpush1.msra.mxu0 0.0
    %364 = vmatprep.subr.mxu0 0.0
    %365 = vmatpush1.msra.mxu0 0.0
    %366 = vmatprep.subr.mxu0 0.0
    %367 = vmatpush1.msra.mxu0 0.0
    %368 = vmatprep.subr.mxu0 0.0
    %369 = vmatpush1.msra.mxu0 0.0
    %370 = vmatprep.mubr.f32.mxu0 0.0
    %371 = vmatmul.mubr.f32.gmra.mrb[0].mxu0 %v304
    %v372 = vpop.f32.mrb[0].mxu0
    %v373 = vadd.f32 %v227, %v372
    %v374 = vpop.f32.mrb[0].mxu0
    %375 = vdwg.mxu0
    %376 = vmatprep.subr.mxu0 0.0
    %377 = vmatpush1.msra.mxu0 %v220
    %378 = vmatprep.subr.mxu0 0.0
    %379 = vmatpush1.msra.mxu0 0.0
    %380 = vmatprep.subr.mxu0 0.0
    %381 = vmatpush1.msra.mxu0 0.0
    %382 = vmatprep.subr.mxu0 0.0
    %383 = vmatpush1.msra.mxu0 0.0
    %384 = vmatprep.subr.mxu0 0.0
    %385 = vmatpush1.msra.mxu0 0.0
    %386 = vmatprep.subr.mxu0 0.0
    %387 = vmatpush1.msra.mxu0 0.0
    %388 = vmatprep.subr.mxu0 0.0
    %389 = vmatpush1.msra.mxu0 0.0
    %390 = vmatprep.subr.mxu0 0.0
    %391 = vmatpush1.msra.mxu0 0.0
    %392 = vmatprep.subr.mxu0 0.0
    %393 = vmatpush1.msra.mxu0 0.0
    %394 = vmatprep.subr.mxu0 0.0
    %395 = vmatpush1.msra.mxu0 0.0
    %396 = vmatprep.subr.mxu0 0.0
    %397 = vmatpush1.msra.mxu0 0.0
    %398 = vmatprep.subr.mxu0 0.0
    %399 = vmatpush1.msra.mxu0 0.0
    %400 = vmatprep.subr.mxu0 0.0
    %401 = vmatpush1.msra.mxu0 0.0
    %402 = vmatprep.subr.mxu0 0.0
    %403 = vmatpush1.msra.mxu0 0.0
    %404 = vmatprep.subr.mxu0 0.0
    %405 = vmatpush1.msra.mxu0 0.0
    %406 = vmatprep.subr.mxu0 0.0
    %407 = vmatpush1.msra.mxu0 0.0
    %408 = vmatprep.subr.mxu0 0.0
    %409 = vmatpush1.msra.mxu0 0.0
    %410 = vmatprep.subr.mxu0 0.0
    %411 = vmatpush1.msra.mxu0 0.0
    %412 = vmatprep.subr.mxu0 0.0
    %413 = vmatpush1.msra.mxu0 0.0
    %414 = vmatprep.subr.mxu0 0.0
    %415 = vmatpush1.msra.mxu0 0.0
    %416 = vmatprep.subr.mxu0 0.0
    %417 = vmatpush1.msra.mxu0 0.0
    %418 = vmatprep.subr.mxu0 0.0
    %419 = vmatpush1.msra.mxu0 0.0
    %420 = vmatprep.subr.mxu0 0.0
    %421 = vmatpush1.msra.mxu0 0.0
    %422 = vmatprep.subr.mxu0 0.0
    %423 = vmatpush1.msra.mxu0 0.0
    %424 = vmatprep.subr.mxu0 0.0
    %425 = vmatpush1.msra.mxu0 0.0
    %426 = vmatprep.subr.mxu0 0.0
    %427 = vmatpush1.msra.mxu0 0.0
    %428 = vmatprep.subr.mxu0 0.0
    %429 = vmatpush1.msra.mxu0 0.0
    %430 = vmatprep.subr.mxu0 0.0
    %431 = vmatpush1.msra.mxu0 0.0
    %432 = vmatprep.subr.mxu0 0.0
    %433 = vmatpush1.msra.mxu0 0.0
    %434 = vmatprep.subr.mxu0 0.0
    %435 = vmatpush1.msra.mxu0 0.0
    %436 = vmatprep.subr.mxu0 0.0
    %437 = vmatpush1.msra.mxu0 0.0
    %438 = vmatprep.subr.mxu0 0.0
    %439 = vmatpush1.msra.mxu0 0.0
    %440 = vmatprep.mubr.f32.mxu0 0.0
    %441 = vmatmul.mubr.f32.gmra.mrb[0].mxu0 %v231
    %v442 = vpop.f32.mrb[0].mxu0
    %v443 = vadd.f32 %v227, %v442
    %v444 = vpop.f32.mrb[0].mxu0
    %445 = vdwg.mxu0
    %446 = vmatprep.subr.mxu0 0.0
    %447 = vmatpush1.msra.mxu0 %v124
    %448 = vmatprep.subr.mxu0 0.0
    %449 = vmatpush1.msra.mxu0 %v125
    %450 = vmatprep.subr.mxu0 0.0
    %451 = vmatpush1.msra.mxu0 %v126
    %452 = vmatprep.subr.mxu0 0.0
    %453 = vmatpush1.msra.mxu0 %v127
    %454 = vmatprep.subr.mxu0 0.0
    %455 = vmatpush1.msra.mxu0 %v128
    %456 = vmatprep.subr.mxu0 0.0
    %457 = vmatpush1.msra.mxu0 %v129
    %458 = vmatprep.subr.mxu0 0.0
    %459 = vmatpush1.msra.mxu0 %v130
    %460 = vmatprep.subr.mxu0 0.0
    %461 = vmatpush1.msra.mxu0 %v131
    %462 = vmatprep.subr.mxu0 0.0
    %463 = vmatpush1.msra.mxu0 %v132
    %464 = vmatprep.subr.mxu0 0.0
    %465 = vmatpush1.msra.mxu0 %v133
    %466 = vmatprep.subr.mxu0 0.0
    %467 = vmatpush1.msra.mxu0 %v134
    %468 = vmatprep.subr.mxu0 0.0
    %469 = vmatpush1.msra.mxu0 %v135
    %470 = vmatprep.subr.mxu0 0.0
    %471 = vmatpush1.msra.mxu0 %v136
    %472 = vmatprep.subr.mxu0 0.0
    %473 = vmatpush1.msra.mxu0 %v137
    %474 = vmatprep.subr.mxu0 0.0
    %475 = vmatpush1.msra.mxu0 %v138
    %476 = vmatprep.subr.mxu0 0.0
    %477 = vmatpush1.msra.mxu0 %v139
    %478 = vmatprep.subr.mxu0 0.0
    %479 = vmatpush1.msra.mxu0 0.0
    %480 = vmatprep.subr.mxu0 0.0
    %481 = vmatpush1.msra.mxu0 0.0
    %482 = vmatprep.subr.mxu0 0.0
    %483 = vmatpush1.msra.mxu0 0.0
    %484 = vmatprep.subr.mxu0 0.0
    %485 = vmatpush1.msra.mxu0 0.0
    %486 = vmatprep.subr.mxu0 0.0
    %487 = vmatpush1.msra.mxu0 0.0
    %488 = vmatprep.subr.mxu0 0.0
    %489 = vmatpush1.msra.mxu0 0.0
    %490 = vmatprep.subr.mxu0 0.0
    %491 = vmatpush1.msra.mxu0 0.0
    %492 = vmatprep.subr.mxu0 0.0
    %493 = vmatpush1.msra.mxu0 0.0
    %494 = vmatprep.subr.mxu0 0.0
    %495 = vmatpush1.msra.mxu0 0.0
    %496 = vmatprep.subr.mxu0 0.0
    %497 = vmatpush1.msra.mxu0 0.0
    %498 = vmatprep.subr.mxu0 0.0
    %499 = vmatpush1.msra.mxu0 0.0
    %500 = vmatprep.subr.mxu0 0.0
    %501 = vmatpush1.msra.mxu0 0.0
    %502 = vmatprep.subr.mxu0 0.0
    %503 = vmatpush1.msra.mxu0 0.0
    %504 = vmatprep.subr.mxu0 0.0
    %505 = vmatpush1.msra.mxu0 0.0
    %506 = vmatprep.subr.mxu0 0.0
    %507 = vmatpush1.msra.mxu0 0.0
    %508 = vmatprep.subr.mxu0 0.0
    %509 = vmatpush1.msra.mxu0 0.0
    %510 = vmatprep.mubr.f32.mxu0 0.0
    %511 = vmatmul.mubr.f32.gmra.mrb[0].mxu0 %v300
    %v512 = vpop.f32.mrb[0].mxu0
    %v513 = vadd.f32 0.0, %v512
    %v514 = vpop.f32.mrb[0].mxu0
    %515 = vdwg.mxu0
    %v517 = vlaneseq
    %v518 = vshrl.u32 %v517, 7
    %v519 = vsub.s32 0, %v518
    %v520 = vrot.slane %v140, %v519
    %522 = vmatprep.subr.mxu0 0.0
    %523 = vmatpush1.msra.mxu0 %v513
    %524 = vmatprep.subr.mxu0 0.0
    %525 = vmatpush1.msra.mxu0 0.0
    %526 = vmatprep.subr.mxu0 0.0
    %527 = vmatpush1.msra.mxu0 0.0
    %528 = vmatprep.subr.mxu0 0.0
    %529 = vmatpush1.msra.mxu0 0.0
    %530 = vmatprep.subr.mxu0 0.0
    %531 = vmatpush1.msra.mxu0 0.0
    %532 = vmatprep.subr.mxu0 0.0
    %533 = vmatpush1.msra.mxu0 0.0
    %534 = vmatprep.subr.mxu0 0.0
    %535 = vmatpush1.msra.mxu0 0.0
    %536 = vmatprep.subr.mxu0 0.0
    %537 = vmatpush1.msra.mxu0 0.0
    %538 = vmatprep.subr.mxu0 0.0
    %539 = vmatpush1.msra.mxu0 0.0
    %540 = vmatprep.subr.mxu0 0.0
    %541 = vmatpush1.msra.mxu0 0.0
    %542 = vmatprep.subr.mxu0 0.0
    %543 = vmatpush1.msra.mxu0 0.0
    %544 = vmatprep.subr.mxu0 0.0
    %545 = vmatpush1.msra.mxu0 0.0
    %546 = vmatprep.subr.mxu0 0.0
    %547 = vmatpush1.msra.mxu0 0.0
    %548 = vmatprep.subr.mxu0 0.0
    %549 = vmatpush1.msra.mxu0 0.0
    %550 = vmatprep.subr.mxu0 0.0
    %551 = vmatpush1.msra.mxu0 0.0
    %552 = vmatprep.subr.mxu0 0.0
    %553 = vmatpush1.msra.mxu0 0.0
    %554 = vmatprep.subr.mxu0 0.0
    %555 = vmatpush1.msra.mxu0 0.0
    %556 = vmatprep.subr.mxu0 0.0
    %557 = vmatpush1.msra.mxu0 0.0
    %558 = vmatprep.subr.mxu0 0.0
    %559 = vmatpush1.msra.mxu0 0.0
    %560 = vmatprep.subr.mxu0 0.0
    %561 = vmatpush1.msra.mxu0 0.0
    %562 = vmatprep.subr.mxu0 0.0
    %563 = vmatpush1.msra.mxu0 0.0
    %564 = vmatprep.subr.mxu0 0.0
    %565 = vmatpush1.msra.mxu0 0.0
    %566 = vmatprep.subr.mxu0 0.0
    %567 = vmatpush1.msra.mxu0 0.0
    %568 = vmatprep.subr.mxu0 0.0
    %569 = vmatpush1.msra.mxu0 0.0
    %570 = vmatprep.subr.mxu0 0.0
    %571 = vmatpush1.msra.mxu0 0.0
    %572 = vmatprep.subr.mxu0 0.0
    %573 = vmatpush1.msra.mxu0 0.0
    %574 = vmatprep.subr.mxu0 0.0
    %575 = vmatpush1.msra.mxu0 0.0
    %576 = vmatprep.subr.mxu0 0.0
    %577 = vmatpush1.msra.mxu0 0.0
    %578 = vmatprep.subr.mxu0 0.0
    %579 = vmatpush1.msra.mxu0 0.0
    %580 = vmatprep.subr.mxu0 0.0
    %581 = vmatpush1.msra.mxu0 0.0
    %582 = vmatprep.subr.mxu0 0.0
    %583 = vmatpush1.msra.mxu0 0.0
    %584 = vmatprep.subr.mxu0 0.0
    %585 = vmatpush1.msra.mxu0 0.0
    %586 = vmatprep.mubr.f32.mxu0 0.0
    %587 = vmatmul.mubr.f32.gmra.mrb[0].mxu0 %v231
    %v588 = vpop.f32.mrb[0].mxu0
    %v589 = vadd.f32 %v520, %v588
    %v590 = vpop.f32.mrb[0].mxu0
    %591 = vdwg.mxu0
    %v592 = vrot.slane %v300, 4
    %v593 = vadd.f32 %v300, %v592
    %v594 = vrot.slane %v593, 2
    %v595 = vadd.f32 %v593, %v594
    %v596 = vrot.slane %v595, 1
    %v597 = vadd.f32 %v595, %v596
    %v598 = vrcp.pop 8.0
    %v599 = vmul.f32 %v597, %v598
    %v600 = vmul.f32 %v300, %v300
    %v601 = vrot.slane %v600, 4
    %v602 = vadd.f32 %v600, %v601
    %v603 = vrot.slane %v602, 2
    %v604 = vadd.f32 %v602, %v603
    %v605 = vrot.slane %v604, 1
    %v606 = vadd.f32 %v604, %v605
    %v607 = vmul.f32 %v606, %v598
    %v608 = vmul.f32 %v599, %v599
    %v609 = vsub.f32 %v607, %v608
    %v610 = vsub.f32 %v300, %v599
    %v611 = vadd.f32 %v609, 1e-05
    %v612 = vrsqrt.pop %v611
    %v613 = vmul.f32 %v610, %v612
    %v615 = vlaneseq
    %v616 = vshrl.u32 %v615, 7
    %v617 = vsub.s32 0, %v616
    %v618 = vrot.slane %v141, %v617
    %v620 = vmul.f32 %v613, %v618
    %v622 = vlaneseq
    %v623 = vshrl.u32 %v622, 7
    %v624 = vsub.s32 0, %v623
    %v625 = vrot.slane %v142, %v624
    %v627 = vadd.f32 %v620, %v625
    %vm628 = vcmp.gt.f32.partialorder %v627, 0.0
    %v629 = vmin.f32 %v627, 0.0
    %v630 = vmul.f32 %v629, 1.442695
    %v631 = vpow.pop %v630
    %v632 = vsub.f32 %v631, 1.0
    %v633 = vsel %vm628, %v627, %v632
    %v634 = vrot.slane %v373, 4
    %v635 = vadd.f32 %v373, %v634
    %v636 = vrot.slane %v635, 2
    %v637 = vadd.f32 %v635, %v636
    %v638 = vrot.slane %v637, 1
    %v639 = vadd.f32 %v637, %v638
    %v640 = vmul.f32 %v639, %v598
    %v641 = vmul.f32 %v373, %v373
    %v642 = vrot.slane %v641, 4
    %v643 = vadd.f32 %v641, %v642
    %v644 = vrot.slane %v643, 2
    %v645 = vadd.f32 %v643, %v644
    %v646 = vrot.slane %v645, 1
    %v647 = vadd.f32 %v645, %v646
    %v648 = vmul.f32 %v647, %v598
    %v649 = vmul.f32 %v640, %v640
    %v650 = vsub.f32 %v648, %v649
    %v651 = vsub.f32 %v373, %v640
    %v652 = vadd.f32 %v650, 1e-05
    %v653 = vrsqrt.pop %v652
    %v654 = vmul.f32 %v651, %v653
    %v655 = vmul.f32 %v654, %v618
    %v656 = vadd.f32 %v655, %v625
    %vm657 = vcmp.gt.f32.partialorder %v656, 0.0
    %v658 = vmin.f32 %v656, 0.0
    %v659 = vmul.f32 %v658, 1.442695
    %v660 = vpow.pop %v659
    %v661 = vsub.f32 %v660, 1.0
    %v662 = vsel %vm657, %v656, %v661
    %v663 = vrot.slane %v443, 4
    %v664 = vadd.f32 %v443, %v663
    %v665 = vrot.slane %v664, 2
    %v666 = vadd.f32 %v664, %v665
    %v667 = vrot.slane %v666, 1
    %v668 = vadd.f32 %v666, %v667
    %v669 = vmul.f32 %v668, %v598
    %v670 = vmul.f32 %v443, %v443
    %v671 = vrot.slane %v670, 4
    %v672 = vadd.f32 %v670, %v671
    %v673 = vrot.slane %v672, 2
    %v674 = vadd.f32 %v672, %v673
    %v675 = vrot.slane %v674, 1
    %v676 = vadd.f32 %v674, %v675
    %v677 = vmul.f32 %v676, %v598
    %v678 = vmul.f32 %v669, %v669
    %v679 = vsub.f32 %v677, %v678
    %v680 = vsub.f32 %v443, %v669
    %v681 = vadd.f32 %v679, 1e-05
    %v682 = vrsqrt.pop %v681
    %v683 = vmul.f32 %v680, %v682
    %v684 = vmul.f32 %v683, %v618
    %v685 = vadd.f32 %v684, %v625
    %vm686 = vcmp.gt.f32.partialorder %v685, 0.0
    %v687 = vmin.f32 %v685, 0.0
    %v688 = vmul.f32 %v687, 1.442695
    %v689 = vpow.pop %v688
    %v690 = vsub.f32 %v689, 1.0
    %v691 = vsel %vm686, %v685, %v690
    %692 = vst [vmem:[#allocation12] sm:$0xff] %v300
    %693 = vst [vmem:[#allocation13] sm:$0xff] %v589
    %v694 = vsub.f32 %v104, %v589
    %v695 = vmul.f32 %v694, %v694
    %696 = vadd.xlane.f32.xlu0 %v695
    %v697 = vpop.xlane.xlu0 %696
    %v698 = vrot.slane %v697, 4
    %v699 = vadd.f32 %v697, %v698
    %v700 = vrot.slane %v699, 2
    %v701 = vadd.f32 %v699, %v700
    %v702 = vrot.slane %v701, 1
    %v703 = vadd.f32 %v701, %v702
    %s704 = vtos %v703
    %v705 = vrcp.pop 128.0
    %s706 = vtos %v705
    %s707 = smul.f32 %s704, %s706
    %v708 = vmul.f32 %v633, %v633
    %709 = vadd.xlane.f32.xlu0 %v708
    %v710 = vpop.xlane.xlu0 %709
    %v711 = vmax.f32 %v710, 1e-24
    %v712 = vrsqrt.pop %v711
    %v713 = vmul.f32 %v633, %v712
    %v714 = vmul.f32 %v662, %v662
    %715 = vadd.xlane.f32.xlu0 %v714
    %v716 = vpop.xlane.xlu0 %715
    %v717 = vmax.f32 %v716, 1e-24
    %v718 = vrsqrt.pop %v717
    %v719 = vmul.f32 %v662, %v718
    %v720 = vmul.f32 %v691, %v691
    %721 = vadd.xlane.f32.xlu0 %v720
    %v722 = vpop.xlane.xlu0 %721
    %v723 = vmax.f32 %v722, 1e-24
    %v724 = vrsqrt.pop %v723
    %v725 = vmul.f32 %v691, %v724
    %v726 = vmul.f32 %v713, %v719
    %727 = vadd.xlane.f32.xlu0 %v726
    %v728 = vpop.xlane.xlu0 %727
    %v729 = vmul.f32 %v728, 2.0
    %730 = vmatprep.subr.mxu0 0.0
    %731 = vmatpush1.xpose.msra.mxu0 %v725
    %732 = vmatprep.subr.mxu0 0.0
    %733 = vmatpush1.xpose.msra.mxu0 0.0
    %734 = vmatprep.subr.mxu0 0.0
    %735 = vmatpush1.xpose.msra.mxu0 0.0
    %736 = vmatprep.subr.mxu0 0.0
    %737 = vmatpush1.xpose.msra.mxu0 0.0
    %738 = vmatprep.subr.mxu0 0.0
    %739 = vmatpush1.xpose.msra.mxu0 0.0
    %740 = vmatprep.subr.mxu0 0.0
    %741 = vmatpush1.xpose.msra.mxu0 0.0
    %742 = vmatprep.subr.mxu0 0.0
    %743 = vmatpush1.xpose.msra.mxu0 0.0
    %744 = vmatprep.subr.mxu0 0.0
    %745 = vmatpush1.xpose.msra.mxu0 0.0
    %746 = vmatprep.subr.mxu0 0.0
    %747 = vmatpush1.xpose.msra.mxu0 0.0
    %748 = vmatprep.subr.mxu0 0.0
    %749 = vmatpush1.xpose.msra.mxu0 0.0
    %750 = vmatprep.subr.mxu0 0.0
    %751 = vmatpush1.xpose.msra.mxu0 0.0
    %752 = vmatprep.subr.mxu0 0.0
    %753 = vmatpush1.xpose.msra.mxu0 0.0
    %754 = vmatprep.subr.mxu0 0.0
    %755 = vmatpush1.xpose.msra.mxu0 0.0
    %756 = vmatprep.subr.mxu0 0.0
    %757 = vmatpush1.xpose.msra.mxu0 0.0
    %758 = vmatprep.subr.mxu0 0.0
    %759 = vmatpush1.xpose.msra.mxu0 0.0
    %760 = vmatprep.subr.mxu0 0.0
    %761 = vmatpush1.xpose.msra.mxu0 0.0
    %762 = vmatprep.subr.mxu0 0.0
    %763 = vmatpush1.xpose.msra.mxu0 0.0
    %764 = vmatprep.subr.mxu0 0.0
    %765 = vmatpush1.xpose.msra.mxu0 0.0
    %766 = vmatprep.subr.mxu0 0.0
    %767 = vmatpush1.xpose.msra.mxu0 0.0
    %768 = vmatprep.subr.mxu0 0.0
    %769 = vmatpush1.xpose.msra.mxu0 0.0
    %770 = vmatprep.subr.mxu0 0.0
    %771 = vmatpush1.xpose.msra.mxu0 0.0
    %772 = vmatprep.subr.mxu0 0.0
    %773 = vmatpush1.xpose.msra.mxu0 0.0
    %774 = vmatprep.subr.mxu0 0.0
    %775 = vmatpush1.xpose.msra.mxu0 0.0
    %776 = vmatprep.subr.mxu0 0.0
    %777 = vmatpush1.xpose.msra.mxu0 0.0
    %778 = vmatprep.subr.mxu0 0.0
    %779 = vmatpush1.xpose.msra.mxu0 0.0
    %780 = vmatprep.subr.mxu0 0.0
    %781 = vmatpush1.xpose.msra.mxu0 0.0
    %782 = vmatprep.subr.mxu0 0.0
    %783 = vmatpush1.xpose.msra.mxu0 0.0
    %784 = vmatprep.subr.mxu0 0.0
    %785 = vmatpush1.xpose.msra.mxu0 0.0
    %786 = vmatprep.subr.mxu0 0.0
    %787 = vmatpush1.xpose.msra.mxu0 0.0
    %788 = vmatprep.subr.mxu0 0.0
    %789 = vmatpush1.xpose.msra.mxu0 0.0
    %790 = vmatprep.subr.mxu0 0.0
    %791 = vmatpush1.xpose.msra.mxu0 0.0
    %792 = vmatprep.subr.mxu0 0.0
    %793 = vmatpush1.xpose.msra.mxu0 0.0
    %794 = vmatprep.mubr.f32.mxu0 0.0
    %795 = vmatmul.mubr.f32.gmra.mrb[0].mxu0 %v713
    %v796 = vpop.f32.mrb[0].mxu0
    %v797 = vadd.f32 0.0, %v796
    %v798 = vpop.f32.mrb[0].mxu0
    %799 = vdwg.mxu0
    %v800 = vmul.f32 %v797, 2.0
    %v801 = vsel %vm229, %v800, -inf
    %802 = vmax.xlane.f32.xlu0 %v801
    %v803 = vpop.xlane.xlu0 %802
    %v804 = vsub.f32 %v800, %v803
    %v805 = vmul.f32 %v804, 1.442695
    %v806 = vpow.pop %v805
    %v807 = vsel %vm229, %v806, 0.0
    %808 = vadd.xlane.f32.xlu0 %v807
    %v809 = vpop.xlane.xlu0 %808
    %v810 = vlog2.pop %v809
    %v811 = vmul.f32 %v810, 0.6931472
    %v812 = vadd.f32 %v803, %v811
    %v813 = vmax.f32 %v729, %v812
    %v814 = vsub.f32 %v729, %v813
    %v815 = vmul.f32 %v814, 1.442695
    %v816 = vpow.pop %v815
    %v817 = vsub.f32 %v812, %v813
    %v818 = vmul.f32 %v817, 1.442695
    %v819 = vpow.pop %v818
    %v820 = vadd.f32 %v816, %v819
    %v821 = vlog2.pop %v820
    %v822 = vmul.f32 %v821, 0.6931472
    %v823 = vadd.f32 %v813, %v822
    %v824 = vsub.f32 %v823, %v729
    %vm825 = vcmask 7168
    %v826 = vsel %vm825, %v824, 0.0
    %827 = vadd.xlane.f32.xlu0 %v826
    %v828 = vpop.xlane.xlu0 %827
    %v829 = vrot.slane %v828, 4
    %v830 = vadd.f32 %v828, %v829
    %v831 = vrot.slane %v830, 2
    %v832 = vadd.f32 %v830, %v831
    %v833 = vrot.slane %v832, 1
    %v834 = vadd.f32 %v832, %v833
    %s835 = vtos %v834
    %v836 = vrcp.pop 8.0
    %s837 = vtos %v836
    %s838 = smul.f32 %s835, %s837
    %s839 = smul.f32 %s838, 0.2
    %s840 = sadd.f32 %s707, %s839
    %s841 = scalar_lea.smem [#allocation15], 0
    %842 = sst [smem:[%s841]] %s840
    // Predicated region
    $region58: #{tpu_custom_call.1} parent=1 // pred_check
      _
    $region59: #{tpu_custom_call.1} parent=1 // pred_check_branch
      %844 = sbr.rel (0) target = $region61
    $region60: #{tpu_custom_call.1} parent=1 // pred_region
      %s846 = ssub.s32 128, 128
      %847 = vsyncadd [#allocation4], %s846
      %s849 = sshll.u32 [#allocation12], 4
      %s850 = int_to_ptr.vmem [resolvable:$true] %s849
      %852 = dma.vmem_to_hbm [thread:$0]  %s850, 128, %s9, [#allocation4]
    $region61: #{tpu_custom_call.1} parent=1 // pred_fallthru
      _
    // Predicated region
    $region62: #{tpu_custom_call.1} parent=1 // pred_check
      _
    $region63: #{tpu_custom_call.1} parent=1 // pred_check_branch
      %854 = sbr.rel (0) target = $region65
    $region64: #{tpu_custom_call.1} parent=1 // pred_region
      %s856 = ssub.s32 128, 128
      %857 = vsyncadd [#allocation14], %s856
      %s859 = sshll.u32 [#allocation13], 4
      %s860 = int_to_ptr.vmem [resolvable:$true] %s859
      %862 = dma.vmem_to_hbm [thread:$0]  %s860, 128, %s10, [#allocation14]
    $region65: #{tpu_custom_call.1} parent=1 // pred_fallthru
      _
    // Predicated region
    $region66: #{tpu_custom_call.1} parent=1 // pred_check
      _
    $region67: #{tpu_custom_call.1} parent=1 // pred_check_branch
      %864 = sbr.rel (0) target = $region69
    $region68: #{tpu_custom_call.1} parent=1 // pred_region
      %s866 = ssub.s32 16, 16
      %867 = vsyncadd [#allocation5], %s866
      %870 = dma.smem_to_hbm [#allocation15], 16, %s11, [#allocation5]
    $region69: #{tpu_custom_call.1} parent=1 // pred_fallthru
      _
    // Predicated region
    $region70: #{tpu_custom_call.1} parent=1 // pred_check
      _
    $region71: #{tpu_custom_call.1} parent=1 // pred_check_branch
      %872 = sbr.rel (0) target = $region73
    $region72: #{tpu_custom_call.1} parent=1 // pred_region
      %873 = dma.done [#allocation4], 128
    $region73: #{tpu_custom_call.1} parent=1 // pred_fallthru
      _
    // Predicated region
    $region74: #{tpu_custom_call.1} parent=1 // pred_check
      _
    $region75: #{tpu_custom_call.1} parent=1 // pred_check_branch
      %875 = sbr.rel (0) target = $region77
    $region76: #{tpu_custom_call.1} parent=1 // pred_region
      %876 = dma.done [#allocation14], 128
    $region77: #{tpu_custom_call.1} parent=1 // pred_fallthru
      _
    // Predicated region
    $region78: #{tpu_custom_call.1} parent=1 // pred_check
      _
    $region79: #{tpu_custom_call.1} parent=1 // pred_check_branch
      %878 = sbr.rel (0) target = $region81
    $region80: #{tpu_custom_call.1} parent=1 // pred_region
      %879 = dma.done [#allocation5], 16
    $region81: #{tpu_custom_call.1} parent=1 // pred_fallthru
      _
    %880 = sfence
    %881 = vsyncpa [#allocation3], 1
    %882 = vsyncpa [#allocation7], 1
    %883 = vsyncpa [#allocation10], 1
    %884 = vsyncpa [#allocation4], 1
    %885 = vsyncpa [#allocation14], 1
    %886 = vsyncpa [#allocation5], 1

</llo_original>
